<compile_context>
chip_gen: v7x
topology: tpu7x:2x2x1
jax: 0.10.0
libtpu: 0.0.40
codegen_flags: <defaults>
</compile_context>

<pallas_src>
import functools

import jax
import jax.numpy as jnp
from jax import lax
from jax.experimental import pallas as pl
from jax.experimental.pallas import tpu as pltpu


_INT_MAX = int(jnp.iinfo(jnp.int32).max)


def _round_up(x, m):
    return ((x + m - 1) // m) * m


def _ffnn_policy_kernel(obs_ref,
                        w1, b1, w2, b2, w3, b3, w4, b4, w5, b5, wh, bh,
                        out_ref, *env_refs,
                        n_rows, out_dim, env_dim, tb, single_tile):
    """One batch tile: 5 hidden layers + fused (policy||env) head + argmax."""
    x = obs_ref[...]

    def dense(a, w_ref, b_ref):
        w = w_ref[...]                       # weights pre-cast (f32 or bf16) in wrapper
        # MXU matmul with f32 accumulate; bias-add / ReLU / argmax stay f32
        # (v5e has no bf16 VPU/EUP).
        return jnp.dot(a.astype(w.dtype), w,
                       preferred_element_type=jnp.float32) + b_ref[...]

    a1 = jnp.maximum(dense(x, w1, b1), 0.0)
    a2 = jnp.maximum(dense(a1, w2, b2), 0.0)
    a3 = dense(a2, w3, b3)                          # no relu (matches PyTorch code)
    a4 = jnp.maximum(dense(a3, w4, b4), 0.0)
    a5 = jnp.maximum(dense(a4, w5, b5), 0.0)

    # Fused head: columns [0, out_dim) are the policy output, columns
    # [out_dim, out_dim+env_dim) are the env logits.  One MXU pass (N <= 128).
    head = dense(a5, wh, bh)                        # (TB, out_dim + env_dim), f32

    out_ref[...] = head[:, :out_dim]                # lane-offset-0 slice, no relayout

    # ---- env head: global flattened argmax, slim epilogue ---------------------
    # Reduce along lanes first; all further masking / flat-index math is (TB,1).
    cols = lax.broadcasted_iota(jnp.int32, head.shape, 1)
    env_vals = jnp.where(cols >= out_dim, head, -jnp.inf)            # (TB, H)
    row_max = jnp.max(env_vals, axis=-1, keepdims=True)              # (TB, 1)
    col_idx = jnp.min(
        jnp.where(env_vals == row_max, cols - out_dim, _INT_MAX),
        axis=-1, keepdims=True)                                      # (TB, 1)

    row_ids = (pl.program_id(0) * tb
               + lax.broadcasted_iota(jnp.int32, (tb, 1), 0))        # global row ids
    row_ok = row_ids < n_rows                                        # mask pad rows
    row_max = jnp.where(row_ok, row_max, -jnp.inf)
    flat_idx = row_ids * env_dim + col_idx                           # (TB, 1)

    m = jnp.max(row_max, keepdims=True)                              # (1, 1) f32
    idx = jnp.min(jnp.where(row_max == m, flat_idx, _INT_MAX),
                  keepdims=True)                                     # (1, 1) int32

    if single_tile:
        # Fast path: the argmax is already global; emit it directly.
        env_ref, = env_refs
        env_ref[...] = jnp.broadcast_to(idx, (8, 128))    # only [0, 0] meaningful
    else:
        # Per-tile partials; tiny O(T) combine happens in the wrapper.
        pmax_ref, pidx_ref = env_refs
        pmax_ref[0] = jnp.broadcast_to(m, (8, 128))
        pidx_ref[0] = jnp.broadcast_to(idx, (8, 128))


@functools.partial(jax.jit, static_argnames=("tb", "use_bf16"))
def ffnn_policy_forward(obs, params, tb=1024, use_bf16=False):
    """obs: [B, in_dim] f32.  params: weights [in, out], biases [1, out].

    Returns (output [B, out_dim] f32, env scalar int32), matching
    FeedForwardNNPolicy.forward (env = flattened global argmax of the env head).
    """
    B, in_dim = obs.shape
    out_dim = params["w6"].shape[1]
    env_dim = params["we"].shape[1]
    head_dim = out_dim + env_dim

    # --- batch tile selection --------------------------------------------------
    TB = min(_round_up(tb, 8), _round_up(B, 8))
    if B >= 256:
        # Keep at least 2 tiles so the "parallel" batch axis can be sharded
        # across both TensorCores on v7x (near-free on single-TC v5e/v6e).
        TB = min(TB, _round_up(pl.cdiv(B, 2), 8))
    T = pl.cdiv(B, TB)
    B_pad = T * TB
    if B_pad != B:
        obs = jnp.pad(obs, ((0, B_pad - B), (0, 0)))

    # --- fused head + (optional) one-time bf16 weight cast ----------------------
    wdt = jnp.bfloat16 if use_bf16 else jnp.float32
    wh = jnp.concatenate([params["w6"], params["we"]], axis=1)
    bh = jnp.concatenate([params["b6"], params["be"]], axis=1)
    weight_args = (params["w1"].astype(wdt), params["b1"],
                   params["w2"].astype(wdt), params["b2"],
                   params["w3"].astype(wdt), params["b3"],
                   params["w4"].astype(wdt), params["b4"],
                   params["w5"].astype(wdt), params["b5"],
                   wh.astype(wdt), bh)

    obs_spec = pl.BlockSpec((TB, in_dim), lambda i: (i, 0))          # tiled over batch
    w_specs = [pl.BlockSpec(a.shape, lambda i: (0, 0))               # VMEM-resident
               for a in weight_args]

    # --- VMEM budget & cost hint -----------------------------------------------
    act_bytes = TB * 128 * 4                       # one (TB,128) f32 activation slab
    vmem_limit = int(min(64 << 20, max(32 << 20, 16 * act_bytes + (4 << 20))))
    flops = 2 * B_pad * (in_dim * 128 + 3 * 128 * 128 + 128 * 64 + 64 * head_dim)
    weight_bytes = sum(int(a.size) * a.dtype.itemsize for a in weight_args)
    bytes_accessed = (B_pad * in_dim * 4 + B_pad * out_dim * 4
                      + weight_bytes + T * 8 * 128 * 8)
    ce = pl.CostEstimate(flops=int(flops), transcendentals=0,
                         bytes_accessed=int(bytes_accessed))

    kernel = functools.partial(
        _ffnn_policy_kernel,
        n_rows=B, out_dim=out_dim, env_dim=env_dim, tb=TB, single_tile=(T == 1))

    if T == 1:
        # Small-batch fast path: env argmax written directly, no combine.
        out_pad, env_slab = pl.pallas_call(
            kernel,
            grid=(1,),
            in_specs=[obs_spec] + w_specs,
            out_specs=(
                pl.BlockSpec((TB, out_dim), lambda i: (i, 0)),
                pl.BlockSpec((8, 128), lambda i: (0, 0)),
            ),
            out_shape=(
                jax.ShapeDtypeStruct((B_pad, out_dim), jnp.float32),
                jax.ShapeDtypeStruct((8, 128), jnp.int32),
            ),
            compiler_params=pltpu.CompilerParams(
                dimension_semantics=("arbitrary",),
                vmem_limit_bytes=vmem_limit),
            cost_estimate=ce,
        )(obs, *weight_args)
        return out_pad[:B], env_slab[0, 0]

    out_pad, pmax, pidx = pl.pallas_call(
        kernel,
        grid=(T,),
        in_specs=[obs_spec] + w_specs,
        out_specs=(
            pl.BlockSpec((TB, out_dim), lambda i: (i, 0)),
            pl.BlockSpec((1, 8, 128), lambda i: (i, 0, 0)),
            pl.BlockSpec((1, 8, 128), lambda i: (i, 0, 0)),
        ),
        out_shape=(
            jax.ShapeDtypeStruct((B_pad, out_dim), jnp.float32),
            jax.ShapeDtypeStruct((T, 8, 128), jnp.float32),
            jax.ShapeDtypeStruct((T, 8, 128), jnp.int32),
        ),
        compiler_params=pltpu.CompilerParams(
            dimension_semantics=("parallel",),
            vmem_limit_bytes=vmem_limit),
        cost_estimate=ce,
    )(obs, *weight_args)

    out = out_pad[:B]

    # Tiny O(T) cross-tile combine: global max, first-occurrence flat index.
    tile_max = pmax[:, 0, 0]
    tile_idx = pidx[:, 0, 0]
    best = jnp.max(tile_max)
    env = jnp.min(jnp.where(tile_max == best, tile_idx, _INT_MAX))
    return out, env


def init_params(key, in_dim, out_dim):
    """Deterministic synthetic init (module shapes from __init__)."""
    dims = [(in_dim, 128), (128, 128), (128, 128), (128, 128),
            (128, 64), (64, out_dim), (64, 3)]
    names = ["1", "2", "3", "4", "5", "6", "e"]
    params = {}
    for name, (fan_in, fan_out) in zip(names, dims):
        key, kw, kb = jax.random.split(key, 3)
        scale = 1.0 / jnp.sqrt(jnp.float32(fan_in))
        params[f"w{name}"] = jax.random.uniform(
            kw, (fan_in, fan_out), jnp.float32, -scale, scale)
        params[f"b{name}"] = jax.random.uniform(
            kb, (1, fan_out), jnp.float32, -scale, scale)
    return params


def _reference(obs, p):
    a1 = jax.nn.relu(obs @ p["w1"] + p["b1"])
    a2 = jax.nn.relu(a1 @ p["w2"] + p["b2"])
    a3 = a2 @ p["w3"] + p["b3"]
    a4 = jax.nn.relu(a3 @ p["w4"] + p["b4"])
    a5 = jax.nn.relu(a4 @ p["w5"] + p["b5"])
    out = a5 @ p["w6"] + p["b6"]
    env = jnp.argmax(a5 @ p["we"] + p["be"])   # global flattened argmax, like torch
    return out, env


if __name__ == "__main__":
    key = jax.random.PRNGKey(0)
    in_dim, out_dim = 8, 4
    key, k_obs, k_p, k_obs2 = jax.random.split(key, 4)
    params = init_params(k_p, in_dim, out_dim)

    # --- small batch: T == 1 fast path (typical per-step RL call) ---------------
    obs_small = jax.random.normal(k_obs, (2, in_dim), jnp.float32)
    out, env = ffnn_policy_forward(obs_small, params)
    out = jax.block_until_ready(out)
    env = jax.block_until_ready(env)
    ref_out, ref_env = _reference(obs_small, params)
    assert out.shape == (2, out_dim)
    assert jnp.allclose(out, ref_out, atol=1e-4, rtol=1e-3), "output mismatch (B=2)"
    assert int(env) == int(ref_env), "env argmax mismatch (B=2)"

    # --- larger batch, explicit small tile: 3-tile grid + padding rows ----------
    obs_big = jax.random.normal(k_obs2, (300, in_dim), jnp.float32)
    out_b, env_b = ffnn_policy_forward(obs_big, params, tb=128)
    out_b = jax.block_until_ready(out_b)
    env_b = jax.block_until_ready(env_b)
    ref_out_b, ref_env_b = _reference(obs_big, params)
    assert jnp.allclose(out_b, ref_out_b, atol=1e-4, rtol=1e-3), \
        "output mismatch (B=300, tb=128)"
    assert int(env_b) == int(ref_env_b), "env argmax mismatch (B=300, tb=128)"

    # --- larger batch, default tile: T >= 2 cap kicks in (two 152-row tiles) ----
    out_c, env_c = ffnn_policy_forward(obs_big, params)
    out_c = jax.block_until_ready(out_c)
    env_c = jax.block_until_ready(env_c)
    assert jnp.allclose(out_c, ref_out_b, atol=1e-4, rtol=1e-3), \
        "output mismatch (B=300, default tb)"
    assert int(env_c) == int(ref_env_b), "env argmax mismatch (B=300, default tb)"

    # --- bf16 MXU path (f32 accumulate): looser tolerance, argmax ties may flip -
    out_d, env_d = ffnn_policy_forward(obs_big, params, use_bf16=True)
    out_d = jax.block_until_ready(out_d)
    env_d = jax.block_until_ready(env_d)
    assert jnp.allclose(out_d, ref_out_b, atol=2e-2, rtol=2e-2), "output mismatch (bf16)"
    assert 0 <= int(env_d) < 300 * 3, "env index out of range (bf16)"

    print("KERNEL_OK")
</pallas_src>

<mosaic_0001>
module attributes {stable_mosaic.version = 11 : i64} {
  func.func @_ffnn_policy_kernel(%arg0: i32, %arg1: memref<8x8xf32, #tpu.memory_space<vmem>>, %arg2: memref<8x128xf32, #tpu.memory_space<vmem>>, %arg3: memref<1x128xf32, #tpu.memory_space<vmem>>, %arg4: memref<128x128xf32, #tpu.memory_space<vmem>>, %arg5: memref<1x128xf32, #tpu.memory_space<vmem>>, %arg6: memref<128x128xf32, #tpu.memory_space<vmem>>, %arg7: memref<1x128xf32, #tpu.memory_space<vmem>>, %arg8: memref<128x128xf32, #tpu.memory_space<vmem>>, %arg9: memref<1x128xf32, #tpu.memory_space<vmem>>, %arg10: memref<128x64xf32, #tpu.memory_space<vmem>>, %arg11: memref<1x64xf32, #tpu.memory_space<vmem>>, %arg12: memref<64x7xf32, #tpu.memory_space<vmem>>, %arg13: memref<1x7xf32, #tpu.memory_space<vmem>>, %arg14: memref<8x4xf32, #tpu.memory_space<vmem>>, %arg15: memref<8x128xi32, #tpu.memory_space<vmem>>) attributes {dimension_semantics = [#tpu.dimension_semantics<arbitrary>], iteration_bounds = array<i64: 1>, scalar_prefetch = 0 : i64, scratch_operands = 0 : i64, tpu.core_type = #tpu.core_type<tc>, window_params = [{transform_indices = @transform_0, window_bounds = array<i64: 8, 8>}, {pipeline_mode = #tpu.pipeline_mode<synchronous>, transform_indices = @transform_1, window_bounds = array<i64: 8, 128>}, {pipeline_mode = #tpu.pipeline_mode<synchronous>, transform_indices = @transform_2, window_bounds = array<i64: 1, 128>}, {pipeline_mode = #tpu.pipeline_mode<synchronous>, transform_indices = @transform_3, window_bounds = array<i64: 128, 128>}, {pipeline_mode = #tpu.pipeline_mode<synchronous>, transform_indices = @transform_4, window_bounds = array<i64: 1, 128>}, {pipeline_mode = #tpu.pipeline_mode<synchronous>, transform_indices = @transform_5, window_bounds = array<i64: 128, 128>}, {pipeline_mode = #tpu.pipeline_mode<synchronous>, transform_indices = @transform_6, window_bounds = array<i64: 1, 128>}, {pipeline_mode = #tpu.pipeline_mode<synchronous>, transform_indices = @transform_7, window_bounds = array<i64: 128, 128>}, {pipeline_mode = #tpu.pipeline_mode<synchronous>, transform_indices = @transform_8, window_bounds = array<i64: 1, 128>}, {pipeline_mode = #tpu.pipeline_mode<synchronous>, transform_indices = @transform_9, window_bounds = array<i64: 128, 64>}, {pipeline_mode = #tpu.pipeline_mode<synchronous>, transform_indices = @transform_10, window_bounds = array<i64: 1, 64>}, {pipeline_mode = #tpu.pipeline_mode<synchronous>, transform_indices = @transform_11, window_bounds = array<i64: 64, 7>}, {pipeline_mode = #tpu.pipeline_mode<synchronous>, transform_indices = @transform_12, window_bounds = array<i64: 1, 7>}, {transform_indices = @transform_13, window_bounds = array<i64: 8, 4>}, {pipeline_mode = #tpu.pipeline_mode<synchronous>, transform_indices = @transform_14, window_bounds = array<i64: 8, 128>}]} {
    %c0 = arith.constant 0 : index
    %c0_0 = arith.constant 0 : index
    %0 = vector.load %arg1[%c0, %c0_0] : memref<8x8xf32, #tpu.memory_space<vmem>>, vector<8x8xf32>
    %c0_1 = arith.constant 0 : index
    %c0_2 = arith.constant 0 : index
    %1 = vector.load %arg2[%c0_1, %c0_2] : memref<8x128xf32, #tpu.memory_space<vmem>>, vector<8x128xf32>
    %cst = arith.constant dense<0.000000e+00> : vector<8x128xf32>
    %2 = tpu.matmul %0, %1, %cst {dimension_numbers = #tpu.dot_dimension_numbers<[1], [0], [0], [1], [0, 0, 1, 1], [], []>} : vector<8x8xf32>, vector<8x128xf32>, vector<8x128xf32> -> vector<8x128xf32>
    %c0_3 = arith.constant 0 : index
    %c0_4 = arith.constant 0 : index
    %3 = vector.load %arg3[%c0_3, %c0_4] : memref<1x128xf32, #tpu.memory_space<vmem>>, vector<1x128xf32>
    %4 = vector.broadcast %3 : vector<1x128xf32> to vector<8x128xf32>
    %5 = arith.addf %2, %4 : vector<8x128xf32>
    %cst_5 = arith.constant 0.000000e+00 : f32
    %6 = vector.broadcast %cst_5 : f32 to vector<8x128xf32>
    %7 = arith.maximumf %5, %6 : vector<8x128xf32>
    %c0_6 = arith.constant 0 : index
    %c0_7 = arith.constant 0 : index
    %8 = vector.load %arg4[%c0_6, %c0_7] : memref<128x128xf32, #tpu.memory_space<vmem>>, vector<128x128xf32>
    %cst_8 = arith.constant dense<0.000000e+00> : vector<8x128xf32>
    %9 = tpu.matmul %7, %8, %cst_8 {dimension_numbers = #tpu.dot_dimension_numbers<[1], [0], [0], [1], [0, 0, 1, 1], [], []>} : vector<8x128xf32>, vector<128x128xf32>, vector<8x128xf32> -> vector<8x128xf32>
    %c0_9 = arith.constant 0 : index
    %c0_10 = arith.constant 0 : index
    %10 = vector.load %arg5[%c0_9, %c0_10] : memref<1x128xf32, #tpu.memory_space<vmem>>, vector<1x128xf32>
    %11 = vector.broadcast %10 : vector<1x128xf32> to vector<8x128xf32>
    %12 = arith.addf %9, %11 : vector<8x128xf32>
    %cst_11 = arith.constant 0.000000e+00 : f32
    %13 = vector.broadcast %cst_11 : f32 to vector<8x128xf32>
    %14 = arith.maximumf %12, %13 : vector<8x128xf32>
    %c0_12 = arith.constant 0 : index
    %c0_13 = arith.constant 0 : index
    %15 = vector.load %arg6[%c0_12, %c0_13] : memref<128x128xf32, #tpu.memory_space<vmem>>, vector<128x128xf32>
    %cst_14 = arith.constant dense<0.000000e+00> : vector<8x128xf32>
    %16 = tpu.matmul %14, %15, %cst_14 {dimension_numbers = #tpu.dot_dimension_numbers<[1], [0], [0], [1], [0, 0, 1, 1], [], []>} : vector<8x128xf32>, vector<128x128xf32>, vector<8x128xf32> -> vector<8x128xf32>
    %c0_15 = arith.constant 0 : index
    %c0_16 = arith.constant 0 : index
    %17 = vector.load %arg7[%c0_15, %c0_16] : memref<1x128xf32, #tpu.memory_space<vmem>>, vector<1x128xf32>
    %18 = vector.broadcast %17 : vector<1x128xf32> to vector<8x128xf32>
    %19 = arith.addf %16, %18 : vector<8x128xf32>
    %c0_17 = arith.constant 0 : index
    %c0_18 = arith.constant 0 : index
    %20 = vector.load %arg8[%c0_17, %c0_18] : memref<128x128xf32, #tpu.memory_space<vmem>>, vector<128x128xf32>
    %cst_19 = arith.constant dense<0.000000e+00> : vector<8x128xf32>
    %21 = tpu.matmul %19, %20, %cst_19 {dimension_numbers = #tpu.dot_dimension_numbers<[1], [0], [0], [1], [0, 0, 1, 1], [], []>} : vector<8x128xf32>, vector<128x128xf32>, vector<8x128xf32> -> vector<8x128xf32>
    %c0_20 = arith.constant 0 : index
    %c0_21 = arith.constant 0 : index
    %22 = vector.load %arg9[%c0_20, %c0_21] : memref<1x128xf32, #tpu.memory_space<vmem>>, vector<1x128xf32>
    %23 = vector.broadcast %22 : vector<1x128xf32> to vector<8x128xf32>
    %24 = arith.addf %21, %23 : vector<8x128xf32>
    %cst_22 = arith.constant 0.000000e+00 : f32
    %25 = vector.broadcast %cst_22 : f32 to vector<8x128xf32>
    %26 = arith.maximumf %24, %25 : vector<8x128xf32>
    %c0_23 = arith.constant 0 : index
    %c0_24 = arith.constant 0 : index
    %27 = vector.load %arg10[%c0_23, %c0_24] : memref<128x64xf32, #tpu.memory_space<vmem>>, vector<128x64xf32>
    %cst_25 = arith.constant dense<0.000000e+00> : vector<8x64xf32>
    %28 = tpu.matmul %26, %27, %cst_25 {dimension_numbers = #tpu.dot_dimension_numbers<[1], [0], [0], [1], [0, 0, 1, 1], [], []>} : vector<8x128xf32>, vector<128x64xf32>, vector<8x64xf32> -> vector<8x64xf32>
    %c0_26 = arith.constant 0 : index
    %c0_27 = arith.constant 0 : index
    %29 = vector.load %arg11[%c0_26, %c0_27] : memref<1x64xf32, #tpu.memory_space<vmem>>, vector<1x64xf32>
    %30 = vector.broadcast %29 : vector<1x64xf32> to vector<8x64xf32>
    %31 = arith.addf %28, %30 : vector<8x64xf32>
    %cst_28 = arith.constant 0.000000e+00 : f32
    %32 = vector.broadcast %cst_28 : f32 to vector<8x64xf32>
    %33 = arith.maximumf %31, %32 : vector<8x64xf32>
    %c0_29 = arith.constant 0 : index
    %c0_30 = arith.constant 0 : index
    %34 = vector.load %arg12[%c0_29, %c0_30] : memref<64x7xf32, #tpu.memory_space<vmem>>, vector<64x7xf32>
    %cst_31 = arith.constant dense<0.000000e+00> : vector<8x7xf32>
    %35 = tpu.matmul %33, %34, %cst_31 {dimension_numbers = #tpu.dot_dimension_numbers<[1], [0], [0], [1], [0, 0, 1, 1], [], []>} : vector<8x64xf32>, vector<64x7xf32>, vector<8x7xf32> -> vector<8x7xf32>
    %c0_32 = arith.constant 0 : index
    %c0_33 = arith.constant 0 : index
    %36 = vector.load %arg13[%c0_32, %c0_33] : memref<1x7xf32, #tpu.memory_space<vmem>>, vector<1x7xf32>
    %37 = vector.broadcast %36 : vector<1x7xf32> to vector<8x7xf32>
    %38 = arith.addf %35, %37 : vector<8x7xf32>
    %39 = vector.extract_strided_slice %38 {offsets = [0, 0], sizes = [8, 4], strides = [1, 1]} : vector<8x7xf32> to vector<8x4xf32>
    %c0_34 = arith.constant 0 : index
    %c0_35 = arith.constant 0 : index
    %40 = vector.load %arg14[%c0_34, %c0_35] : memref<8x4xf32, #tpu.memory_space<vmem>>, vector<8x4xf32>
    tpu.vector_store %arg14[%c0_34, %c0_35], %39 {strides = array<i32>} : memref<8x4xf32, #tpu.memory_space<vmem>>, vector<8x4xf32>,
    %41 = tpu.iota {dimensions = array<i32: 1>} : vector<8x7xi32>
    %c4_i32 = arith.constant 4 : i32
    %42 = vector.broadcast %c4_i32 : i32 to vector<8x7xi32>
    %43 = arith.cmpi sge, %41, %42 : vector<8x7xi32>
    %cst_36 = arith.constant 0xFF800000 : f32
    %44 = vector.broadcast %cst_36 : f32 to vector<8x7xf32>
    %45 = arith.select %43, %38, %44 : vector<8x7xi1>, vector<8x7xf32>
    %cst_37 = arith.constant dense<0xFF800000> : vector<8xf32>
    %46 = vector.multi_reduction <maximumf>, %45, %cst_37 [1] : vector<8x7xf32> to vector<8xf32>
    %47 = vector.shape_cast %46 : vector<8xf32> to vector<8x1xf32>
    %48 = vector.broadcast %47 : vector<8x1xf32> to vector<8x7xf32>
    %49 = arith.cmpf oeq, %45, %48 : vector<8x7xf32>
    %c4_i32_38 = arith.constant 4 : i32
    %50 = vector.broadcast %c4_i32_38 : i32 to vector<8x7xi32>
    %51 = arith.subi %41, %50 : vector<8x7xi32>
    %c2147483647_i32 = arith.constant 2147483647 : i32
    %52 = vector.broadcast %c2147483647_i32 : i32 to vector<8x7xi32>
    %53 = arith.select %49, %51, %52 : vector<8x7xi1>, vector<8x7xi32>
    %cst_39 = arith.constant dense<2147483647> : vector<8xi32>
    %54 = vector.multi_reduction <minsi>, %53, %cst_39 [1] : vector<8x7xi32> to vector<8xi32>
    %55 = vector.shape_cast %54 : vector<8xi32> to vector<8x1xi32>
    %c8_i32 = arith.constant 8 : i32
    %56 = arith.muli %arg0, %c8_i32 : i32
    %57 = tpu.iota {dimensions = array<i32: 0>} : vector<8x1xi32>
    %58 = vector.broadcast %56 : i32 to vector<8x1xi32>
    %59 = arith.addi %58, %57 : vector<8x1xi32>
    %c2_i32 = arith.constant 2 : i32
    %60 = vector.broadcast %c2_i32 : i32 to vector<8x1xi32>
    %61 = arith.cmpi slt, %59, %60 : vector<8x1xi32>
    %cst_40 = arith.constant 0xFF800000 : f32
    %62 = vector.broadcast %cst_40 : f32 to vector<8x1xf32>
    %63 = arith.select %61, %47, %62 : vector<8x1xi1>, vector<8x1xf32>
    %c3_i32 = arith.constant 3 : i32
    %64 = vector.broadcast %c3_i32 : i32 to vector<8x1xi32>
    %65 = arith.muli %59, %64 : vector<8x1xi32>
    %66 = arith.addi %65, %55 : vector<8x1xi32>
    %67 = vector.shape_cast %63 : vector<8x1xf32> to vector<1x8x1xf32>
    %cst_41 = arith.constant dense<0xFF800000> : vector<1xf32>
    %68 = vector.multi_reduction <maximumf>, %67, %cst_41 [1, 2] : vector<1x8x1xf32> to vector<1xf32>
    %69 = vector.shape_cast %68 : vector<1xf32> to vector<1x1x1xf32>
    %70 = vector.extract %69[0, 0, 0] : f32 from vector<1x1x1xf32>
    %71 = vector.broadcast %70 : f32 to vector<1x1xf32>
    %72 = vector.broadcast %71 : vector<1x1xf32> to vector<8x1xf32>
    %73 = arith.cmpf oeq, %63, %72 : vector<8x1xf32>
    %c2147483647_i32_42 = arith.constant 2147483647 : i32
    %74 = vector.broadcast %c2147483647_i32_42 : i32 to vector<8x1xi32>
    %75 = arith.select %73, %66, %74 : vector<8x1xi1>, vector<8x1xi32>
    %76 = vector.shape_cast %75 : vector<8x1xi32> to vector<1x8x1xi32>
    %cst_43 = arith.constant dense<2147483647> : vector<1xi32>
    %77 = vector.multi_reduction <minsi>, %76, %cst_43 [1, 2] : vector<1x8x1xi32> to vector<1xi32>
    %78 = vector.shape_cast %77 : vector<1xi32> to vector<1x1x1xi32>
    %79 = vector.extract %78[0, 0, 0] : i32 from vector<1x1x1xi32>
    %80 = vector.broadcast %79 : i32 to vector<1x1xi32>
    %81 = vector.shape_cast %80 : vector<1x1xi32> to vector<1x1xi32>
    %82 = vector.broadcast %81 : vector<1x1xi32> to vector<8x128xi32>
    %c0_44 = arith.constant 0 : index
    %c0_45 = arith.constant 0 : index
    %83 = vector.load %arg15[%c0_44, %c0_45] : memref<8x128xi32, #tpu.memory_space<vmem>>, vector<8x128xi32>
    tpu.vector_store %arg15[%c0_44, %c0_45], %82 {strides = array<i32>} : memref<8x128xi32, #tpu.memory_space<vmem>>, vector<8x128xi32>,
    return
  }
  func.func @transform_0(%arg0: i32) -> (i32, i32) {
    %c0_i32 = arith.constant 0 : i32
    %c0_i32_0 = arith.constant 0 : i32
    return %arg0, %c0_i32 : i32, i32
  }
  func.func @transform_1(%arg0: i32) -> (i32, i32) {
    %c0_i32 = arith.constant 0 : i32
    %c0_i32_0 = arith.constant 0 : i32
    %c0_i32_1 = arith.constant 0 : i32
    return %c0_i32, %c0_i32_0 : i32, i32
  }
  func.func @transform_2(%arg0: i32) -> (i32, i32) {
    %c0_i32 = arith.constant 0 : i32
    %c0_i32_0 = arith.constant 0 : i32
    %c0_i32_1 = arith.constant 0 : i32
    return %c0_i32, %c0_i32_0 : i32, i32
  }
  func.func @transform_3(%arg0: i32) -> (i32, i32) {
    %c0_i32 = arith.constant 0 : i32
    %c0_i32_0 = arith.constant 0 : i32
    %c0_i32_1 = arith.constant 0 : i32
    return %c0_i32, %c0_i32_0 : i32, i32
  }
  func.func @transform_4(%arg0: i32) -> (i32, i32) {
    %c0_i32 = arith.constant 0 : i32
    %c0_i32_0 = arith.constant 0 : i32
    %c0_i32_1 = arith.constant 0 : i32
    return %c0_i32, %c0_i32_0 : i32, i32
  }
  func.func @transform_5(%arg0: i32) -> (i32, i32) {
    %c0_i32 = arith.constant 0 : i32
    %c0_i32_0 = arith.constant 0 : i32
    %c0_i32_1 = arith.constant 0 : i32
    return %c0_i32, %c0_i32_0 : i32, i32
  }
  func.func @transform_6(%arg0: i32) -> (i32, i32) {
    %c0_i32 = arith.constant 0 : i32
    %c0_i32_0 = arith.constant 0 : i32
    %c0_i32_1 = arith.constant 0 : i32
    return %c0_i32, %c0_i32_0 : i32, i32
  }
  func.func @transform_7(%arg0: i32) -> (i32, i32) {
    %c0_i32 = arith.constant 0 : i32
    %c0_i32_0 = arith.constant 0 : i32
    %c0_i32_1 = arith.constant 0 : i32
    return %c0_i32, %c0_i32_0 : i32, i32
  }
  func.func @transform_8(%arg0: i32) -> (i32, i32) {
    %c0_i32 = arith.constant 0 : i32
    %c0_i32_0 = arith.constant 0 : i32
    %c0_i32_1 = arith.constant 0 : i32
    return %c0_i32, %c0_i32_0 : i32, i32
  }
  func.func @transform_9(%arg0: i32) -> (i32, i32) {
    %c0_i32 = arith.constant 0 : i32
    %c0_i32_0 = arith.constant 0 : i32
    %c0_i32_1 = arith.constant 0 : i32
    return %c0_i32, %c0_i32_0 : i32, i32
  }
  func.func @transform_10(%arg0: i32) -> (i32, i32) {
    %c0_i32 = arith.constant 0 : i32
    %c0_i32_0 = arith.constant 0 : i32
    %c0_i32_1 = arith.constant 0 : i32
    return %c0_i32, %c0_i32_0 : i32, i32
  }
  func.func @transform_11(%arg0: i32) -> (i32, i32) {
    %c0_i32 = arith.constant 0 : i32
    %c0_i32_0 = arith.constant 0 : i32
    %c0_i32_1 = arith.constant 0 : i32
    return %c0_i32, %c0_i32_0 : i32, i32
  }
  func.func @transform_12(%arg0: i32) -> (i32, i32) {
    %c0_i32 = arith.constant 0 : i32
    %c0_i32_0 = arith.constant 0 : i32
    %c0_i32_1 = arith.constant 0 : i32
    return %c0_i32, %c0_i32_0 : i32, i32
  }
  func.func @transform_13(%arg0: i32) -> (i32, i32) {
    %c0_i32 = arith.constant 0 : i32
    %c0_i32_0 = arith.constant 0 : i32
    return %arg0, %c0_i32 : i32, i32
  }
  func.func @transform_14(%arg0: i32) -> (i32, i32) {
    %c0_i32 = arith.constant 0 : i32
    %c0_i32_0 = arith.constant 0 : i32
    %c0_i32_1 = arith.constant 0 : i32
    return %c0_i32, %c0_i32_0 : i32, i32
  }
}

</mosaic_0001>

<llo_original>
// kernel: ffnn_policy_forward.1
$region0: #{ffnn_policy_forward.1}
  #allocation0 [shape = 'u32[]', space=smem, size = 0x4, offset = 0x4, fixed_abs, tag = 'smem constant byte address 0x4 - core index']
  #allocation1 [shape = 'u32[144,128]{1,0:T(1,128)}', space=vmem, size = 0x12000, scoped, tag = 'internal scratch']
  %s0 = inlined_call_operand.vmem [shape: f32[8,8], index: 0, kind: input, shape index: {}]
  %s1 = inlined_call_operand.hbm [shape: f32[8,128], index: 1, kind: input, shape index: {}]
  %s2 = inlined_call_operand.hbm [shape: f32[1,128], index: 2, kind: input, shape index: {}]
  %s3 = inlined_call_operand.vmem [shape: f32[128,128], index: 3, kind: input, shape index: {}]
  %s4 = inlined_call_operand.hbm [shape: f32[1,128], index: 4, kind: input, shape index: {}]
  %s5 = inlined_call_operand.vmem [shape: f32[128,128], index: 5, kind: input, shape index: {}]
  %s6 = inlined_call_operand.hbm [shape: f32[1,128], index: 6, kind: input, shape index: {}]
  %s7 = inlined_call_operand.hbm [shape: f32[128,128], index: 7, kind: input, shape index: {}]
  %s8 = inlined_call_operand.hbm [shape: f32[1,128], index: 8, kind: input, shape index: {}]
  %s9 = inlined_call_operand.vmem [shape: f32[128,64], index: 9, kind: input, shape index: {}]
  %s10 = inlined_call_operand.hbm [shape: f32[1,64], index: 10, kind: input, shape index: {}]
  %s11 = inlined_call_operand.vmem [shape: f32[64,7], index: 11, kind: input, shape index: {}]
  %s12 = inlined_call_operand.vmem [shape: f32[1,7], index: 12, kind: input, shape index: {}]
  %s13 = inlined_call_operand.vmem [shape: f32[8,4], index: 13, kind: output, shape index: {0}]
  %s14 = inlined_call_operand.vmem [shape: s32[8,128], index: 14, kind: output, shape index: {1}]
  %15 = xla_tuple %s13, %s14
  %s16 = sld [smem:[#allocation0]]
  $region98: #{ffnn_policy_forward.1} parent=0
    _
  %s18 = ssub.s32 1, %s16
  %s19 = scalar_select 0, %s18, %s16
  $region1: #{ffnn_policy_forward.1} parent=0
    #allocation2 [shape = 'u8[4096]{0}', space=vmem, size = 0x1000, scoped, tag = 'input window, operand 1, single buffered']
    #allocation3 [shape = 's32[1]{0}', space=sflag, size = 0x4, scoped, tag = 'scoped memory for ffnn_policy_forward.1']
    #allocation4 [shape = 'u8[512]{0}', space=vmem, size = 0x400, scoped, tag = 'input window, operand 2, single buffered']
    #allocation5 [shape = 's32[1]{0}', space=sflag, size = 0x4, scoped, tag = 'scoped memory for ffnn_policy_forward.1']
    #allocation6 [shape = 'u8[512]{0}', space=vmem, size = 0x400, scoped, tag = 'input window, operand 4, single buffered']
    #allocation7 [shape = 'u8[512]{0}', space=vmem, size = 0x400, scoped, tag = 'input window, operand 6, single buffered']
    #allocation8 [shape = 's32[1]{0}', space=sflag, size = 0x4, scoped, tag = 'scoped memory for ffnn_policy_forward.1']
    #allocation9 [shape = 'u8[65536]{0}', space=vmem, size = 0x10000, scoped, tag = 'input window, operand 7, single buffered']
    #allocation10 [shape = 'u8[512]{0}', space=vmem, size = 0x400, scoped, tag = 'input window, operand 8, single buffered']
    #allocation11 [shape = 's32[1]{0}', space=sflag, size = 0x4, scoped, tag = 'scoped memory for ffnn_policy_forward.1']
    #allocation12 [shape = 'u8[512]{0}', space=vmem, size = 0x400, scoped, tag = 'input window, operand 10, single buffered']
    %20 = vsyncpa [#allocation3], 0
    %21 = vsyncpa [#allocation5], 0
    %22 = vsyncpa [#allocation8], 0
    %23 = vsyncpa [#allocation11], 0
    // Predicated region
    $region2: #{ffnn_policy_forward.1} parent=1 // pred_check
      _
    $region3: #{ffnn_policy_forward.1} parent=1 // pred_check_branch
      %25 = sbr.rel (0) target = $region5
    $region4: #{ffnn_policy_forward.1} parent=1 // pred_region
      _
    $region5: #{ffnn_policy_forward.1} parent=1 // pred_fallthru
      _
    // Predicated region
    $region6: #{ffnn_policy_forward.1} parent=1 // pred_check
      _
    $region7: #{ffnn_policy_forward.1} parent=1 // pred_check_branch
      %27 = sbr.rel (0) target = $region9
    $region8: #{ffnn_policy_forward.1} parent=1 // pred_region
      %s29 = ssub.s32 128, 128
      %30 = vsyncadd [#allocation3], %s29
      %s32 = sshll.u32 [#allocation2], 4
      %s33 = int_to_ptr.vmem [resolvable:$true] %s32
      %35 = dma.hbm_to_vmem [thread:$0]  %s1, 128, %s33, [#allocation3]
    $region9: #{ffnn_policy_forward.1} parent=1 // pred_fallthru
      _
    // Predicated region
    $region10: #{ffnn_policy_forward.1} parent=1 // pred_check
      _
    $region11: #{ffnn_policy_forward.1} parent=1 // pred_check_branch
      %37 = sbr.rel (0) target = $region13
    $region12: #{ffnn_policy_forward.1} parent=1 // pred_region
      %s39 = ssub.s32 16, 16
      %40 = vsyncadd [#allocation5], %s39
      %s42 = sshll.u32 [#allocation4], 4
      %s43 = int_to_ptr.vmem [resolvable:$true] %s42
      %45 = dma.hbm_to_vmem [thread:$0]  %s2, 16, %s43, [#allocation5]
    $region13: #{ffnn_policy_forward.1} parent=1 // pred_fallthru
      _
    // Predicated region
    $region14: #{ffnn_policy_forward.1} parent=1 // pred_check
      _
    $region15: #{ffnn_policy_forward.1} parent=1 // pred_check_branch
      %47 = sbr.rel (0) target = $region17
    $region16: #{ffnn_policy_forward.1} parent=1 // pred_region
      _
    $region17: #{ffnn_policy_forward.1} parent=1 // pred_fallthru
      _
    // Predicated region
    $region18: #{ffnn_policy_forward.1} parent=1 // pred_check
      _
    $region19: #{ffnn_policy_forward.1} parent=1 // pred_check_branch
      %49 = sbr.rel (0) target = $region21
    $region20: #{ffnn_policy_forward.1} parent=1 // pred_region
      %s51 = ssub.s32 16, 16
      %52 = vsyncadd [#allocation5], %s51
      %s54 = sshll.u32 [#allocation6], 4
      %s55 = int_to_ptr.vmem [resolvable:$true] %s54
      %57 = dma.hbm_to_vmem [thread:$0]  %s4, 16, %s55, [#allocation5]
    $region21: #{ffnn_policy_forward.1} parent=1 // pred_fallthru
      _
    // Predicated region
    $region22: #{ffnn_policy_forward.1} parent=1 // pred_check
      _
    $region23: #{ffnn_policy_forward.1} parent=1 // pred_check_branch
      %59 = sbr.rel (0) target = $region25
    $region24: #{ffnn_policy_forward.1} parent=1 // pred_region
      _
    $region25: #{ffnn_policy_forward.1} parent=1 // pred_fallthru
      _
    // Predicated region
    $region26: #{ffnn_policy_forward.1} parent=1 // pred_check
      _
    $region27: #{ffnn_policy_forward.1} parent=1 // pred_check_branch
      %61 = sbr.rel (0) target = $region29
    $region28: #{ffnn_policy_forward.1} parent=1 // pred_region
      %s63 = ssub.s32 16, 16
      %64 = vsyncadd [#allocation8], %s63
      %s66 = sshll.u32 [#allocation7], 4
      %s67 = int_to_ptr.vmem [resolvable:$true] %s66
      %69 = dma.hbm_to_vmem [thread:$0]  %s6, 16, %s67, [#allocation8]
    $region29: #{ffnn_policy_forward.1} parent=1 // pred_fallthru
      _
    // Predicated region
    $region30: #{ffnn_policy_forward.1} parent=1 // pred_check
      _
    $region31: #{ffnn_policy_forward.1} parent=1 // pred_check_branch
      %71 = sbr.rel (0) target = $region33
    $region32: #{ffnn_policy_forward.1} parent=1 // pred_region
      %s73 = ssub.s32 2048, 2048
      %74 = vsyncadd [#allocation8], %s73
      %s75 = sshll.u32 [#allocation9], 4
      %s76 = int_to_ptr.vmem [resolvable:$true] %s75
      %81 = dma.hbm_to_vmem [thread:$0]  %s7, 2048, %s76, [#allocation8], 128, 128, 8
    $region33: #{ffnn_policy_forward.1} parent=1 // pred_fallthru
      _
    // Predicated region
    $region34: #{ffnn_policy_forward.1} parent=1 // pred_check
      _
    $region35: #{ffnn_policy_forward.1} parent=1 // pred_check_branch
      %83 = sbr.rel (0) target = $region37
    $region36: #{ffnn_policy_forward.1} parent=1 // pred_region
      %s85 = ssub.s32 16, 16
      %86 = vsyncadd [#allocation11], %s85
      %s88 = sshll.u32 [#allocation10], 4
      %s89 = int_to_ptr.vmem [resolvable:$true] %s88
      %91 = dma.hbm_to_vmem [thread:$0]  %s8, 16, %s89, [#allocation11]
    $region37: #{ffnn_policy_forward.1} parent=1 // pred_fallthru
      _
    // Predicated region
    $region38: #{ffnn_policy_forward.1} parent=1 // pred_check
      _
    $region39: #{ffnn_policy_forward.1} parent=1 // pred_check_branch
      %93 = sbr.rel (0) target = $region41
    $region40: #{ffnn_policy_forward.1} parent=1 // pred_region
      _
    $region41: #{ffnn_policy_forward.1} parent=1 // pred_fallthru
      _
    // Predicated region
    $region42: #{ffnn_policy_forward.1} parent=1 // pred_check
      _
    $region43: #{ffnn_policy_forward.1} parent=1 // pred_check_branch
      %95 = sbr.rel (0) target = $region45
    $region44: #{ffnn_policy_forward.1} parent=1 // pred_region
      %s97 = ssub.s32 16, 16
      %98 = vsyncadd [#allocation11], %s97
      %s100 = sshll.u32 [#allocation12], 4
      %s101 = int_to_ptr.vmem [resolvable:$true] %s100
      %103 = dma.hbm_to_vmem [thread:$0]  %s10, 16, %s101, [#allocation11]
    $region45: #{ffnn_policy_forward.1} parent=1 // pred_fallthru
      _
    // Predicated region
    $region46: #{ffnn_policy_forward.1} parent=1 // pred_check
      _
    $region47: #{ffnn_policy_forward.1} parent=1 // pred_check_branch
      %105 = sbr.rel (0) target = $region49
    $region48: #{ffnn_policy_forward.1} parent=1 // pred_region
      _
    $region49: #{ffnn_policy_forward.1} parent=1 // pred_fallthru
      _
    // Predicated region
    $region50: #{ffnn_policy_forward.1} parent=1 // pred_check
      _
    $region51: #{ffnn_policy_forward.1} parent=1 // pred_check_branch
      %107 = sbr.rel (0) target = $region53
    $region52: #{ffnn_policy_forward.1} parent=1 // pred_region
      _
    $region53: #{ffnn_policy_forward.1} parent=1 // pred_fallthru
      _
    // Predicated region
    $region54: #{ffnn_policy_forward.1} parent=1 // pred_check
      _
    $region55: #{ffnn_policy_forward.1} parent=1 // pred_check_branch
      %109 = sbr.rel (0) target = $region57
    $region56: #{ffnn_policy_forward.1} parent=1 // pred_region
      %110 = dma.done [#allocation3], 128
    $region57: #{ffnn_policy_forward.1} parent=1 // pred_fallthru
      _
    // Predicated region
    $region58: #{ffnn_policy_forward.1} parent=1 // pred_check
      _
    $region59: #{ffnn_policy_forward.1} parent=1 // pred_check_branch
      %112 = sbr.rel (0) target = $region61
    $region60: #{ffnn_policy_forward.1} parent=1 // pred_region
      %113 = dma.done [#allocation5], 16
    $region61: #{ffnn_policy_forward.1} parent=1 // pred_fallthru
      _
    // Predicated region
    $region62: #{ffnn_policy_forward.1} parent=1 // pred_check
      _
    $region63: #{ffnn_policy_forward.1} parent=1 // pred_check_branch
      %115 = sbr.rel (0) target = $region65
    $region64: #{ffnn_policy_forward.1} parent=1 // pred_region
      %116 = dma.done [#allocation5], 16
    $region65: #{ffnn_policy_forward.1} parent=1 // pred_fallthru
      _
    // Predicated region
    $region66: #{ffnn_policy_forward.1} parent=1 // pred_check
      _
    $region67: #{ffnn_policy_forward.1} parent=1 // pred_check_branch
      %118 = sbr.rel (0) target = $region69
    $region68: #{ffnn_policy_forward.1} parent=1 // pred_region
      %119 = dma.done [#allocation8], 16
    $region69: #{ffnn_policy_forward.1} parent=1 // pred_fallthru
      _
    // Predicated region
    $region70: #{ffnn_policy_forward.1} parent=1 // pred_check
      _
    $region71: #{ffnn_policy_forward.1} parent=1 // pred_check_branch
      %121 = sbr.rel (0) target = $region73
    $region72: #{ffnn_policy_forward.1} parent=1 // pred_region
      %122 = dma.done [#allocation8], 2048
    $region73: #{ffnn_policy_forward.1} parent=1 // pred_fallthru
      _
    // Predicated region
    $region74: #{ffnn_policy_forward.1} parent=1 // pred_check
      _
    $region75: #{ffnn_policy_forward.1} parent=1 // pred_check_branch
      %124 = sbr.rel (0) target = $region77
    $region76: #{ffnn_policy_forward.1} parent=1 // pred_region
      %125 = dma.done [#allocation11], 16
    $region77: #{ffnn_policy_forward.1} parent=1 // pred_fallthru
      _
    // Predicated region
    $region78: #{ffnn_policy_forward.1} parent=1 // pred_check
      _
    $region79: #{ffnn_policy_forward.1} parent=1 // pred_check_branch
      %127 = sbr.rel (0) target = $region81
    $region80: #{ffnn_policy_forward.1} parent=1 // pred_region
      %128 = dma.done [#allocation11], 16
    $region81: #{ffnn_policy_forward.1} parent=1 // pred_fallthru
      _
    %v129 = vld [vmem:[%s0] sm:$0xff]
    %v130 = vld [vmem:[#allocation2] sm:$0xff]
    %v131 = vld [vmem:[#allocation4] sm:$0x1]
    %v133 = vlaneseq
    %v134 = vshrl.u32 %v133, 7
    %v135 = vsub.s32 0, %v134
    %v136 = vrot.slane %v131, %v135
    %vm138 = vcmask 64512
    %v140 = vsel %vm138, %v129, 0
    %142 = vmatprep.subr.mxu0 0.0
    %143 = vmatpush1.msra.mxu0 %v130
    %144 = vmatprep.subr.mxu0 0.0
    %145 = vmatpush1.msra.mxu0 0.0
    %146 = vmatprep.subr.mxu0 0.0
    %147 = vmatpush1.msra.mxu0 0.0
    %148 = vmatprep.subr.mxu0 0.0
    %149 = vmatpush1.msra.mxu0 0.0
    %150 = vmatprep.subr.mxu0 0.0
    %151 = vmatpush1.msra.mxu0 0.0
    %152 = vmatprep.subr.mxu0 0.0
    %153 = vmatpush1.msra.mxu0 0.0
    %154 = vmatprep.subr.mxu0 0.0
    %155 = vmatpush1.msra.mxu0 0.0
    %156 = vmatprep.subr.mxu0 0.0
    %157 = vmatpush1.msra.mxu0 0.0
    %158 = vmatprep.subr.mxu0 0.0
    %159 = vmatpush1.msra.mxu0 0.0
    %160 = vmatprep.subr.mxu0 0.0
    %161 = vmatpush1.msra.mxu0 0.0
    %162 = vmatprep.subr.mxu0 0.0
    %163 = vmatpush1.msra.mxu0 0.0
    %164 = vmatprep.subr.mxu0 0.0
    %165 = vmatpush1.msra.mxu0 0.0
    %166 = vmatprep.subr.mxu0 0.0
    %167 = vmatpush1.msra.mxu0 0.0
    %168 = vmatprep.subr.mxu0 0.0
    %169 = vmatpush1.msra.mxu0 0.0
    %170 = vmatprep.subr.mxu0 0.0
    %171 = vmatpush1.msra.mxu0 0.0
    %172 = vmatprep.subr.mxu0 0.0
    %173 = vmatpush1.msra.mxu0 0.0
    %174 = vmatprep.subr.mxu0 0.0
    %175 = vmatpush1.msra.mxu0 0.0
    %176 = vmatprep.subr.mxu0 0.0
    %177 = vmatpush1.msra.mxu0 0.0
    %178 = vmatprep.subr.mxu0 0.0
    %179 = vmatpush1.msra.mxu0 0.0
    %180 = vmatprep.subr.mxu0 0.0
    %181 = vmatpush1.msra.mxu0 0.0
    %182 = vmatprep.subr.mxu0 0.0
    %183 = vmatpush1.msra.mxu0 0.0
    %184 = vmatprep.subr.mxu0 0.0
    %185 = vmatpush1.msra.mxu0 0.0
    %186 = vmatprep.subr.mxu0 0.0
    %187 = vmatpush1.msra.mxu0 0.0
    %188 = vmatprep.subr.mxu0 0.0
    %189 = vmatpush1.msra.mxu0 0.0
    %190 = vmatprep.subr.mxu0 0.0
    %191 = vmatpush1.msra.mxu0 0.0
    %192 = vmatprep.subr.mxu0 0.0
    %193 = vmatpush1.msra.mxu0 0.0
    %194 = vmatprep.subr.mxu0 0.0
    %195 = vmatpush1.msra.mxu0 0.0
    %196 = vmatprep.subr.mxu0 0.0
    %197 = vmatpush1.msra.mxu0 0.0
    %198 = vmatprep.subr.mxu0 0.0
    %199 = vmatpush1.msra.mxu0 0.0
    %200 = vmatprep.subr.mxu0 0.0
    %201 = vmatpush1.msra.mxu0 0.0
    %202 = vmatprep.subr.mxu0 0.0
    %203 = vmatpush1.msra.mxu0 0.0
    %204 = vmatprep.subr.mxu0 0.0
    %205 = vmatpush1.msra.mxu0 0.0
    %206 = vmatprep.mubr.f32.mxu0 0.0
    %207 = vmatmul.mubr.f32.gmra.mrb[0].mxu0 %v140
    %v208 = vpop.f32.mrb[0].mxu0
    %v209 = vadd.f32 %v136, %v208
    %v210 = vpop.f32.mrb[0].mxu0
    %211 = vdwg.mxu0
    %v212 = vmax.f32 %v209, 0.0
    %v213 = vld [vmem:[%s3] sm:$0xff]
    %v214 = vld [vmem:[%s3 + $0x8] sm:$0xff]
    %v215 = vld [vmem:[%s3 + $0x10] sm:$0xff]
    %v216 = vld [vmem:[%s3 + $0x18] sm:$0xff]
    %v217 = vld [vmem:[%s3 + $0x20] sm:$0xff]
    %v218 = vld [vmem:[%s3 + $0x28] sm:$0xff]
    %v219 = vld [vmem:[%s3 + $0x30] sm:$0xff]
    %v220 = vld [vmem:[%s3 + $0x38] sm:$0xff]
    %v221 = vld [vmem:[%s3 + $0x40] sm:$0xff]
    %v222 = vld [vmem:[%s3 + $0x48] sm:$0xff]
    %v223 = vld [vmem:[%s3 + $0x50] sm:$0xff]
    %v224 = vld [vmem:[%s3 + $0x58] sm:$0xff]
    %v225 = vld [vmem:[%s3 + $0x60] sm:$0xff]
    %v226 = vld [vmem:[%s3 + $0x68] sm:$0xff]
    %v227 = vld [vmem:[%s3 + $0x70] sm:$0xff]
    %v228 = vld [vmem:[%s3 + $0x78] sm:$0xff]
    %v229 = vld [vmem:[#allocation6] sm:$0x1]
    %v231 = vlaneseq
    %v232 = vshrl.u32 %v231, 7
    %v233 = vsub.s32 0, %v232
    %v234 = vrot.slane %v229, %v233
    %236 = vmatprep.subr.mxu0 0.0
    %237 = vmatpush1.msra.mxu0 %v213
    %238 = vmatprep.subr.mxu0 0.0
    %239 = vmatpush1.msra.mxu0 %v214
    %240 = vmatprep.subr.mxu0 0.0
    %241 = vmatpush1.msra.mxu0 %v215
    %242 = vmatprep.subr.mxu0 0.0
    %243 = vmatpush1.msra.mxu0 %v216
    %244 = vmatprep.subr.mxu0 0.0
    %245 = vmatpush1.msra.mxu0 %v217
    %246 = vmatprep.subr.mxu0 0.0
    %247 = vmatpush1.msra.mxu0 %v218
    %248 = vmatprep.subr.mxu0 0.0
    %249 = vmatpush1.msra.mxu0 %v219
    %250 = vmatprep.subr.mxu0 0.0
    %251 = vmatpush1.msra.mxu0 %v220
    %252 = vmatprep.subr.mxu0 0.0
    %253 = vmatpush1.msra.mxu0 %v221
    %254 = vmatprep.subr.mxu0 0.0
    %255 = vmatpush1.msra.mxu0 %v222
    %256 = vmatprep.subr.mxu0 0.0
    %257 = vmatpush1.msra.mxu0 %v223
    %258 = vmatprep.subr.mxu0 0.0
    %259 = vmatpush1.msra.mxu0 %v224
    %260 = vmatprep.subr.mxu0 0.0
    %261 = vmatpush1.msra.mxu0 %v225
    %262 = vmatprep.subr.mxu0 0.0
    %263 = vmatpush1.msra.mxu0 %v226
    %264 = vmatprep.subr.mxu0 0.0
    %265 = vmatpush1.msra.mxu0 %v227
    %266 = vmatprep.subr.mxu0 0.0
    %267 = vmatpush1.msra.mxu0 %v228
    %268 = vmatprep.subr.mxu0 0.0
    %269 = vmatpush1.msra.mxu0 0.0
    %270 = vmatprep.subr.mxu0 0.0
    %271 = vmatpush1.msra.mxu0 0.0
    %272 = vmatprep.subr.mxu0 0.0
    %273 = vmatpush1.msra.mxu0 0.0
    %274 = vmatprep.subr.mxu0 0.0
    %275 = vmatpush1.msra.mxu0 0.0
    %276 = vmatprep.subr.mxu0 0.0
    %277 = vmatpush1.msra.mxu0 0.0
    %278 = vmatprep.subr.mxu0 0.0
    %279 = vmatpush1.msra.mxu0 0.0
    %280 = vmatprep.subr.mxu0 0.0
    %281 = vmatpush1.msra.mxu0 0.0
    %282 = vmatprep.subr.mxu0 0.0
    %283 = vmatpush1.msra.mxu0 0.0
    %284 = vmatprep.subr.mxu0 0.0
    %285 = vmatpush1.msra.mxu0 0.0
    %286 = vmatprep.subr.mxu0 0.0
    %287 = vmatpush1.msra.mxu0 0.0
    %288 = vmatprep.subr.mxu0 0.0
    %289 = vmatpush1.msra.mxu0 0.0
    %290 = vmatprep.subr.mxu0 0.0
    %291 = vmatpush1.msra.mxu0 0.0
    %292 = vmatprep.subr.mxu0 0.0
    %293 = vmatpush1.msra.mxu0 0.0
    %294 = vmatprep.subr.mxu0 0.0
    %295 = vmatpush1.msra.mxu0 0.0
    %296 = vmatprep.subr.mxu0 0.0
    %297 = vmatpush1.msra.mxu0 0.0
    %298 = vmatprep.subr.mxu0 0.0
    %299 = vmatpush1.msra.mxu0 0.0
    %300 = vmatprep.mubr.f32.mxu0 0.0
    %301 = vmatmul.mubr.f32.gmra.mrb[0].mxu0 %v212
    %v302 = vpop.f32.mrb[0].mxu0
    %v303 = vadd.f32 %v234, %v302
    %v304 = vpop.f32.mrb[0].mxu0
    %305 = vdwg.mxu0
    %v306 = vmax.f32 %v303, 0.0
    %v307 = vld [vmem:[%s5] sm:$0xff]
    %v308 = vld [vmem:[%s5 + $0x8] sm:$0xff]
    %v309 = vld [vmem:[%s5 + $0x10] sm:$0xff]
    %v310 = vld [vmem:[%s5 + $0x18] sm:$0xff]
    %v311 = vld [vmem:[%s5 + $0x20] sm:$0xff]
    %v312 = vld [vmem:[%s5 + $0x28] sm:$0xff]
    %v313 = vld [vmem:[%s5 + $0x30] sm:$0xff]
    %v314 = vld [vmem:[%s5 + $0x38] sm:$0xff]
    %v315 = vld [vmem:[%s5 + $0x40] sm:$0xff]
    %v316 = vld [vmem:[%s5 + $0x48] sm:$0xff]
    %v317 = vld [vmem:[%s5 + $0x50] sm:$0xff]
    %v318 = vld [vmem:[%s5 + $0x58] sm:$0xff]
    %v319 = vld [vmem:[%s5 + $0x60] sm:$0xff]
    %v320 = vld [vmem:[%s5 + $0x68] sm:$0xff]
    %v321 = vld [vmem:[%s5 + $0x70] sm:$0xff]
    %v322 = vld [vmem:[%s5 + $0x78] sm:$0xff]
    %v323 = vld [vmem:[#allocation7] sm:$0x1]
    %v325 = vlaneseq
    %v326 = vshrl.u32 %v325, 7
    %v327 = vsub.s32 0, %v326
    %v328 = vrot.slane %v323, %v327
    %330 = vmatprep.subr.mxu0 0.0
    %331 = vmatpush1.msra.mxu0 %v307
    %332 = vmatprep.subr.mxu0 0.0
    %333 = vmatpush1.msra.mxu0 %v308
    %334 = vmatprep.subr.mxu0 0.0
    %335 = vmatpush1.msra.mxu0 %v309
    %336 = vmatprep.subr.mxu0 0.0
    %337 = vmatpush1.msra.mxu0 %v310
    %338 = vmatprep.subr.mxu0 0.0
    %339 = vmatpush1.msra.mxu0 %v311
    %340 = vmatprep.subr.mxu0 0.0
    %341 = vmatpush1.msra.mxu0 %v312
    %342 = vmatprep.subr.mxu0 0.0
    %343 = vmatpush1.msra.mxu0 %v313
    %344 = vmatprep.subr.mxu0 0.0
    %345 = vmatpush1.msra.mxu0 %v314
    %346 = vmatprep.subr.mxu0 0.0
    %347 = vmatpush1.msra.mxu0 %v315
    %348 = vmatprep.subr.mxu0 0.0
    %349 = vmatpush1.msra.mxu0 %v316
    %350 = vmatprep.subr.mxu0 0.0
    %351 = vmatpush1.msra.mxu0 %v317
    %352 = vmatprep.subr.mxu0 0.0
    %353 = vmatpush1.msra.mxu0 %v318
    %354 = vmatprep.subr.mxu0 0.0
    %355 = vmatpush1.msra.mxu0 %v319
    %356 = vmatprep.subr.mxu0 0.0
    %357 = vmatpush1.msra.mxu0 %v320
    %358 = vmatprep.subr.mxu0 0.0
    %359 = vmatpush1.msra.mxu0 %v321
    %360 = vmatprep.subr.mxu0 0.0
    %361 = vmatpush1.msra.mxu0 %v322
    %362 = vmatprep.subr.mxu0 0.0
    %363 = vmatpush1.msra.mxu0 0.0
    %364 = vmatprep.subr.mxu0 0.0
    %365 = vmatpush1.msra.mxu0 0.0
    %366 = vmatprep.subr.mxu0 0.0
    %367 = vmatpush1.msra.mxu0 0.0
    %368 = vmatprep.subr.mxu0 0.0
    %369 = vmatpush1.msra.mxu0 0.0
    %370 = vmatprep.subr.mxu0 0.0
    %371 = vmatpush1.msra.mxu0 0.0
    %372 = vmatprep.subr.mxu0 0.0
    %373 = vmatpush1.msra.mxu0 0.0
    %374 = vmatprep.subr.mxu0 0.0
    %375 = vmatpush1.msra.mxu0 0.0
    %376 = vmatprep.subr.mxu0 0.0
    %377 = vmatpush1.msra.mxu0 0.0
    %378 = vmatprep.subr.mxu0 0.0
    %379 = vmatpush1.msra.mxu0 0.0
    %380 = vmatprep.subr.mxu0 0.0
    %381 = vmatpush1.msra.mxu0 0.0
    %382 = vmatprep.subr.mxu0 0.0
    %383 = vmatpush1.msra.mxu0 0.0
    %384 = vmatprep.subr.mxu0 0.0
    %385 = vmatpush1.msra.mxu0 0.0
    %386 = vmatprep.subr.mxu0 0.0
    %387 = vmatpush1.msra.mxu0 0.0
    %388 = vmatprep.subr.mxu0 0.0
    %389 = vmatpush1.msra.mxu0 0.0
    %390 = vmatprep.subr.mxu0 0.0
    %391 = vmatpush1.msra.mxu0 0.0
    %392 = vmatprep.subr.mxu0 0.0
    %393 = vmatpush1.msra.mxu0 0.0
    %394 = vmatprep.mubr.f32.mxu0 0.0
    %395 = vmatmul.mubr.f32.gmra.mrb[0].mxu0 %v306
    %v396 = vpop.f32.mrb[0].mxu0
    %v397 = vadd.f32 %v328, %v396
    %v398 = vpop.f32.mrb[0].mxu0
    %399 = vdwg.mxu0
    %v400 = vld [vmem:[#allocation9] sm:$0xff]
    %v401 = vld [vmem:[#allocation9 + $0x8] sm:$0xff]
    %v402 = vld [vmem:[#allocation9 + $0x10] sm:$0xff]
    %v403 = vld [vmem:[#allocation9 + $0x18] sm:$0xff]
    %v404 = vld [vmem:[#allocation9 + $0x20] sm:$0xff]
    %v405 = vld [vmem:[#allocation9 + $0x28] sm:$0xff]
    %v406 = vld [vmem:[#allocation9 + $0x30] sm:$0xff]
    %v407 = vld [vmem:[#allocation9 + $0x38] sm:$0xff]
    %v408 = vld [vmem:[#allocation9 + $0x40] sm:$0xff]
    %v409 = vld [vmem:[#allocation9 + $0x48] sm:$0xff]
    %v410 = vld [vmem:[#allocation9 + $0x50] sm:$0xff]
    %v411 = vld [vmem:[#allocation9 + $0x58] sm:$0xff]
    %v412 = vld [vmem:[#allocation9 + $0x60] sm:$0xff]
    %v413 = vld [vmem:[#allocation9 + $0x68] sm:$0xff]
    %v414 = vld [vmem:[#allocation9 + $0x70] sm:$0xff]
    %v415 = vld [vmem:[#allocation9 + $0x78] sm:$0xff]
    %v416 = vld [vmem:[#allocation10] sm:$0x1]
    %v418 = vlaneseq
    %v419 = vshrl.u32 %v418, 7
    %v420 = vsub.s32 0, %v419
    %v421 = vrot.slane %v416, %v420
    %423 = vmatprep.subr.mxu0 0.0
    %424 = vmatpush1.msra.mxu0 %v400
    %425 = vmatprep.subr.mxu0 0.0
    %426 = vmatpush1.msra.mxu0 %v401
    %427 = vmatprep.subr.mxu0 0.0
    %428 = vmatpush1.msra.mxu0 %v402
    %429 = vmatprep.subr.mxu0 0.0
    %430 = vmatpush1.msra.mxu0 %v403
    %431 = vmatprep.subr.mxu0 0.0
    %432 = vmatpush1.msra.mxu0 %v404
    %433 = vmatprep.subr.mxu0 0.0
    %434 = vmatpush1.msra.mxu0 %v405
    %435 = vmatprep.subr.mxu0 0.0
    %436 = vmatpush1.msra.mxu0 %v406
    %437 = vmatprep.subr.mxu0 0.0
    %438 = vmatpush1.msra.mxu0 %v407
    %439 = vmatprep.subr.mxu0 0.0
    %440 = vmatpush1.msra.mxu0 %v408
    %441 = vmatprep.subr.mxu0 0.0
    %442 = vmatpush1.msra.mxu0 %v409
    %443 = vmatprep.subr.mxu0 0.0
    %444 = vmatpush1.msra.mxu0 %v410
    %445 = vmatprep.subr.mxu0 0.0
    %446 = vmatpush1.msra.mxu0 %v411
    %447 = vmatprep.subr.mxu0 0.0
    %448 = vmatpush1.msra.mxu0 %v412
    %449 = vmatprep.subr.mxu0 0.0
    %450 = vmatpush1.msra.mxu0 %v413
    %451 = vmatprep.subr.mxu0 0.0
    %452 = vmatpush1.msra.mxu0 %v414
    %453 = vmatprep.subr.mxu0 0.0
    %454 = vmatpush1.msra.mxu0 %v415
    %455 = vmatprep.subr.mxu0 0.0
    %456 = vmatpush1.msra.mxu0 0.0
    %457 = vmatprep.subr.mxu0 0.0
    %458 = vmatpush1.msra.mxu0 0.0
    %459 = vmatprep.subr.mxu0 0.0
    %460 = vmatpush1.msra.mxu0 0.0
    %461 = vmatprep.subr.mxu0 0.0
    %462 = vmatpush1.msra.mxu0 0.0
    %463 = vmatprep.subr.mxu0 0.0
    %464 = vmatpush1.msra.mxu0 0.0
    %465 = vmatprep.subr.mxu0 0.0
    %466 = vmatpush1.msra.mxu0 0.0
    %467 = vmatprep.subr.mxu0 0.0
    %468 = vmatpush1.msra.mxu0 0.0
    %469 = vmatprep.subr.mxu0 0.0
    %470 = vmatpush1.msra.mxu0 0.0
    %471 = vmatprep.subr.mxu0 0.0
    %472 = vmatpush1.msra.mxu0 0.0
    %473 = vmatprep.subr.mxu0 0.0
    %474 = vmatpush1.msra.mxu0 0.0
    %475 = vmatprep.subr.mxu0 0.0
    %476 = vmatpush1.msra.mxu0 0.0
    %477 = vmatprep.subr.mxu0 0.0
    %478 = vmatpush1.msra.mxu0 0.0
    %479 = vmatprep.subr.mxu0 0.0
    %480 = vmatpush1.msra.mxu0 0.0
    %481 = vmatprep.subr.mxu0 0.0
    %482 = vmatpush1.msra.mxu0 0.0
    %483 = vmatprep.subr.mxu0 0.0
    %484 = vmatpush1.msra.mxu0 0.0
    %485 = vmatprep.subr.mxu0 0.0
    %486 = vmatpush1.msra.mxu0 0.0
    %487 = vmatprep.mubr.f32.mxu0 0.0
    %488 = vmatmul.mubr.f32.gmra.mrb[0].mxu0 %v397
    %v489 = vpop.f32.mrb[0].mxu0
    %v490 = vadd.f32 %v421, %v489
    %v491 = vpop.f32.mrb[0].mxu0
    %492 = vdwg.mxu0
    %v493 = vmax.f32 %v490, 0.0
    %v494 = vld [vmem:[%s9] sm:$0xff]
    %v495 = vld [vmem:[%s9 + $0x8] sm:$0xff]
    %v496 = vld [vmem:[%s9 + $0x10] sm:$0xff]
    %v497 = vld [vmem:[%s9 + $0x18] sm:$0xff]
    %v498 = vld [vmem:[%s9 + $0x20] sm:$0xff]
    %v499 = vld [vmem:[%s9 + $0x28] sm:$0xff]
    %v500 = vld [vmem:[%s9 + $0x30] sm:$0xff]
    %v501 = vld [vmem:[%s9 + $0x38] sm:$0xff]
    %v502 = vld [vmem:[%s9 + $0x40] sm:$0xff]
    %v503 = vld [vmem:[%s9 + $0x48] sm:$0xff]
    %v504 = vld [vmem:[%s9 + $0x50] sm:$0xff]
    %v505 = vld [vmem:[%s9 + $0x58] sm:$0xff]
    %v506 = vld [vmem:[%s9 + $0x60] sm:$0xff]
    %v507 = vld [vmem:[%s9 + $0x68] sm:$0xff]
    %v508 = vld [vmem:[%s9 + $0x70] sm:$0xff]
    %v509 = vld [vmem:[%s9 + $0x78] sm:$0xff]
    %v510 = vld [vmem:[#allocation12] sm:$0x1]
    %v512 = vlaneseq
    %v513 = vshrl.u32 %v512, 7
    %v514 = vsub.s32 0, %v513
    %v515 = vrot.slane %v510, %v514
    %517 = vmatprep.subr.mxu0 0.0
    %518 = vmatpush1.msra.mxu0 %v494
    %519 = vmatprep.subr.mxu0 0.0
    %520 = vmatpush1.msra.mxu0 %v495
    %521 = vmatprep.subr.mxu0 0.0
    %522 = vmatpush1.msra.mxu0 %v496
    %523 = vmatprep.subr.mxu0 0.0
    %524 = vmatpush1.msra.mxu0 %v497
    %525 = vmatprep.subr.mxu0 0.0
    %526 = vmatpush1.msra.mxu0 %v498
    %527 = vmatprep.subr.mxu0 0.0
    %528 = vmatpush1.msra.mxu0 %v499
    %529 = vmatprep.subr.mxu0 0.0
    %530 = vmatpush1.msra.mxu0 %v500
    %531 = vmatprep.subr.mxu0 0.0
    %532 = vmatpush1.msra.mxu0 %v501
    %533 = vmatprep.subr.mxu0 0.0
    %534 = vmatpush1.msra.mxu0 %v502
    %535 = vmatprep.subr.mxu0 0.0
    %536 = vmatpush1.msra.mxu0 %v503
    %537 = vmatprep.subr.mxu0 0.0
    %538 = vmatpush1.msra.mxu0 %v504
    %539 = vmatprep.subr.mxu0 0.0
    %540 = vmatpush1.msra.mxu0 %v505
    %541 = vmatprep.subr.mxu0 0.0
    %542 = vmatpush1.msra.mxu0 %v506
    %543 = vmatprep.subr.mxu0 0.0
    %544 = vmatpush1.msra.mxu0 %v507
    %545 = vmatprep.subr.mxu0 0.0
    %546 = vmatpush1.msra.mxu0 %v508
    %547 = vmatprep.subr.mxu0 0.0
    %548 = vmatpush1.msra.mxu0 %v509
    %549 = vmatprep.subr.mxu0 0.0
    %550 = vmatpush1.msra.mxu0 0.0
    %551 = vmatprep.subr.mxu0 0.0
    %552 = vmatpush1.msra.mxu0 0.0
    %553 = vmatprep.subr.mxu0 0.0
    %554 = vmatpush1.msra.mxu0 0.0
    %555 = vmatprep.subr.mxu0 0.0
    %556 = vmatpush1.msra.mxu0 0.0
    %557 = vmatprep.subr.mxu0 0.0
    %558 = vmatpush1.msra.mxu0 0.0
    %559 = vmatprep.subr.mxu0 0.0
    %560 = vmatpush1.msra.mxu0 0.0
    %561 = vmatprep.subr.mxu0 0.0
    %562 = vmatpush1.msra.mxu0 0.0
    %563 = vmatprep.subr.mxu0 0.0
    %564 = vmatpush1.msra.mxu0 0.0
    %565 = vmatprep.subr.mxu0 0.0
    %566 = vmatpush1.msra.mxu0 0.0
    %567 = vmatprep.subr.mxu0 0.0
    %568 = vmatpush1.msra.mxu0 0.0
    %569 = vmatprep.subr.mxu0 0.0
    %570 = vmatpush1.msra.mxu0 0.0
    %571 = vmatprep.subr.mxu0 0.0
    %572 = vmatpush1.msra.mxu0 0.0
    %573 = vmatprep.subr.mxu0 0.0
    %574 = vmatpush1.msra.mxu0 0.0
    %575 = vmatprep.subr.mxu0 0.0
    %576 = vmatpush1.msra.mxu0 0.0
    %577 = vmatprep.subr.mxu0 0.0
    %578 = vmatpush1.msra.mxu0 0.0
    %579 = vmatprep.subr.mxu0 0.0
    %580 = vmatpush1.msra.mxu0 0.0
    %581 = vmatprep.mubr.f32.mxu0 0.0
    %582 = vmatmul.mubr.f32.gmra.mrb[0].mxu0 %v493
    %v583 = vpop.f32.mrb[0].mxu0
    %v584 = vadd.f32 %v515, %v583
    %v585 = vpop.f32.mrb[0].mxu0
    %586 = vdwg.mxu0
    %v587 = vmax.f32 %v584, 0.0
    %v588 = vld [vmem:[%s11] sm:$0xff]
    %v589 = vld [vmem:[%s11 + $0x8] sm:$0xff]
    %v590 = vld [vmem:[%s11 + $0x10] sm:$0xff]
    %v591 = vld [vmem:[%s11 + $0x18] sm:$0xff]
    %v592 = vld [vmem:[%s11 + $0x20] sm:$0xff]
    %v593 = vld [vmem:[%s11 + $0x28] sm:$0xff]
    %v594 = vld [vmem:[%s11 + $0x30] sm:$0xff]
    %v595 = vld [vmem:[%s11 + $0x38] sm:$0xff]
    %v596 = vld [vmem:[%s12] sm:$0x1]
    %v598 = vlaneseq
    %v599 = vshrl.u32 %v598, 7
    %v600 = vsub.s32 0, %v599
    %v601 = vrot.slane %v596, %v600
    %vm603 = vcmask 523264
    %v605 = vsel %vm603, %v587, 0
    %607 = vmatprep.subr.mxu0 0.0
    %608 = vmatpush1.msra.mxu0 %v588
    %609 = vmatprep.subr.mxu0 0.0
    %610 = vmatpush1.msra.mxu0 %v589
    %611 = vmatprep.subr.mxu0 0.0
    %612 = vmatpush1.msra.mxu0 %v590
    %613 = vmatprep.subr.mxu0 0.0
    %614 = vmatpush1.msra.mxu0 %v591
    %615 = vmatprep.subr.mxu0 0.0
    %616 = vmatpush1.msra.mxu0 %v592
    %617 = vmatprep.subr.mxu0 0.0
    %618 = vmatpush1.msra.mxu0 %v593
    %619 = vmatprep.subr.mxu0 0.0
    %620 = vmatpush1.msra.mxu0 %v594
    %621 = vmatprep.subr.mxu0 0.0
    %622 = vmatpush1.msra.mxu0 %v595
    %623 = vmatprep.subr.mxu0 0.0
    %624 = vmatpush1.msra.mxu0 0.0
    %625 = vmatprep.subr.mxu0 0.0
    %626 = vmatpush1.msra.mxu0 0.0
    %627 = vmatprep.subr.mxu0 0.0
    %628 = vmatpush1.msra.mxu0 0.0
    %629 = vmatprep.subr.mxu0 0.0
    %630 = vmatpush1.msra.mxu0 0.0
    %631 = vmatprep.subr.mxu0 0.0
    %632 = vmatpush1.msra.mxu0 0.0
    %633 = vmatprep.subr.mxu0 0.0
    %634 = vmatpush1.msra.mxu0 0.0
    %635 = vmatprep.subr.mxu0 0.0
    %636 = vmatpush1.msra.mxu0 0.0
    %637 = vmatprep.subr.mxu0 0.0
    %638 = vmatpush1.msra.mxu0 0.0
    %639 = vmatprep.subr.mxu0 0.0
    %640 = vmatpush1.msra.mxu0 0.0
    %641 = vmatprep.subr.mxu0 0.0
    %642 = vmatpush1.msra.mxu0 0.0
    %643 = vmatprep.subr.mxu0 0.0
    %644 = vmatpush1.msra.mxu0 0.0
    %645 = vmatprep.subr.mxu0 0.0
    %646 = vmatpush1.msra.mxu0 0.0
    %647 = vmatprep.subr.mxu0 0.0
    %648 = vmatpush1.msra.mxu0 0.0
    %649 = vmatprep.subr.mxu0 0.0
    %650 = vmatpush1.msra.mxu0 0.0
    %651 = vmatprep.subr.mxu0 0.0
    %652 = vmatpush1.msra.mxu0 0.0
    %653 = vmatprep.subr.mxu0 0.0
    %654 = vmatpush1.msra.mxu0 0.0
    %655 = vmatprep.subr.mxu0 0.0
    %656 = vmatpush1.msra.mxu0 0.0
    %657 = vmatprep.subr.mxu0 0.0
    %658 = vmatpush1.msra.mxu0 0.0
    %659 = vmatprep.subr.mxu0 0.0
    %660 = vmatpush1.msra.mxu0 0.0
    %661 = vmatprep.subr.mxu0 0.0
    %662 = vmatpush1.msra.mxu0 0.0
    %663 = vmatprep.subr.mxu0 0.0
    %664 = vmatpush1.msra.mxu0 0.0
    %665 = vmatprep.subr.mxu0 0.0
    %666 = vmatpush1.msra.mxu0 0.0
    %667 = vmatprep.subr.mxu0 0.0
    %668 = vmatpush1.msra.mxu0 0.0
    %669 = vmatprep.subr.mxu0 0.0
    %670 = vmatpush1.msra.mxu0 0.0
    %671 = vmatprep.mubr.f32.mxu0 0.0
    %672 = vmatmul.mubr.f32.gmra.mrb[0].mxu0 %v605
    %v673 = vpop.f32.mrb[0].mxu0
    %v674 = vadd.f32 %v601, %v673
    %v675 = vpop.f32.mrb[0].mxu0
    %676 = vdwg.mxu0
    %vm677 = vcmask 31744
    %678 = vst.msk [vmem:[%s13] sm:$0xff] %vm677, %v674
    %v679 = vlaneseq
    %v680 = vand.u32 %v679, 127
    %vm681 = vcmp.ge.s32.totalorder %v680, 4
    %v682 = vsel %vm681, %v674, -inf
    %vm683 = vcmask 56320
    %v684 = vsel %vm683, %v682, -inf
    %685 = vmax.xlane.f32.xlu0 %v684
    %v686 = vpop.xlane.xlu0 %685
    %vm687 = vcmp.eq.f32.partialorder %v682, %v686
    %v688 = vsub.s32 %v680, 4
    %v689 = vsel %vm687, %v688, 2147483647
    %v690 = vsel %vm683, %v689, 2147483647
    %v691 = vand.u32 %v690, 65535
    %v692 = vshra.s32 %v690, 16
    %v693 = vcvt.s32.f32 %v691
    %v694 = vcvt.s32.f32 %v692
    %695 = vmin.xlane.f32.xlu0 %v694
    %v696 = vpop.xlane.xlu0 %695
    %vm697 = vcmp.eq.f32.partialorder %v694, %v696
    %v698 = vsel %vm697, %v693, inf
    %699 = vmin.xlane.f32.xlu0 %v698
    %v700 = vpop.xlane.xlu0 %699
    %v701 = vcvt.f32.s32 %v700
    %v702 = vcvt.f32.s32 %v696
    %v703 = vshll.u32 %v702, 16
    %v704 = vadd.s32 %v703, %v701
    %s705 = smul.u32 0, 8
    %v706 = vlaneseq
    %v707 = vshrl.u32 %v706, 7
    %v708 = vstv %s705
    %v709 = vadd.s32 %v708, %v707
    %vm710 = vcmp.lt.s32.totalorder %v709, 2
    %v711 = vsel %vm710, %v686, -inf
    %v712 = vmul.u32 %v709, 3
    %v713 = vadd.s32 %v712, %v704
    %v714 = vrot.slane %v711, 4
    %v715 = vmax.f32 %v711, %v714
    %v716 = vrot.slane %v715, 2
    %v717 = vmax.f32 %v715, %v716
    %v718 = vrot.slane %v717, 1
    %v719 = vmax.f32 %v717, %v718
    %s720 = vtos %v719
    %v721 = vstv %s720
    %vm722 = vcmp.eq.f32.partialorder %v711, %v721
    %v723 = vsel %vm722, %v713, 2147483647
    %v724 = vrot.slane %v723, 4
    %vm725 = vcmp.lt.s32.totalorder %v723, %v724
    %v726 = vsel %vm725, %v723, %v724
    %v727 = vrot.slane %v726, 2
    %vm728 = vcmp.lt.s32.totalorder %v726, %v727
    %v729 = vsel %vm728, %v726, %v727
    %v730 = vrot.slane %v729, 1
    %vm731 = vcmp.lt.s32.totalorder %v729, %v730
    %v732 = vsel %vm731, %v729, %v730
    %s733 = vtos %v732
    %v734 = vstv %s733
    %735 = vst [vmem:[%s14] sm:$0xff] %v734
    // Predicated region
    $region82: #{ffnn_policy_forward.1} parent=1 // pred_check
      _
    $region83: #{ffnn_policy_forward.1} parent=1 // pred_check_branch
      %737 = sbr.rel (0) target = $region85
    $region84: #{ffnn_policy_forward.1} parent=1 // pred_region
      _
    $region85: #{ffnn_policy_forward.1} parent=1 // pred_fallthru
      _
    // Predicated region
    $region86: #{ffnn_policy_forward.1} parent=1 // pred_check
      _
    $region87: #{ffnn_policy_forward.1} parent=1 // pred_check_branch
      %739 = sbr.rel (0) target = $region89
    $region88: #{ffnn_policy_forward.1} parent=1 // pred_region
      _
    $region89: #{ffnn_policy_forward.1} parent=1 // pred_fallthru
      _
    // Predicated region
    $region90: #{ffnn_policy_forward.1} parent=1 // pred_check
      _
    $region91: #{ffnn_policy_forward.1} parent=1 // pred_check_branch
      %741 = sbr.rel (0) target = $region93
    $region92: #{ffnn_policy_forward.1} parent=1 // pred_region
      _
    $region93: #{ffnn_policy_forward.1} parent=1 // pred_fallthru
      _
    // Predicated region
    $region94: #{ffnn_policy_forward.1} parent=1 // pred_check
      _
    $region95: #{ffnn_policy_forward.1} parent=1 // pred_check_branch
      %743 = sbr.rel (0) target = $region97
    $region96: #{ffnn_policy_forward.1} parent=1 // pred_region
      _
    $region97: #{ffnn_policy_forward.1} parent=1 // pred_fallthru
      _
    %744 = vsyncpa [#allocation3], 1
    %745 = vsyncpa [#allocation5], 1
    %746 = vsyncpa [#allocation8], 1
    %747 = vsyncpa [#allocation11], 1

</llo_original>
